<compile_context>
chip_gen: v6e
topology: v6e:2x2x1
jax: 0.10.0
libtpu: 0.0.40
codegen_flags: <defaults>
</compile_context>

<pallas_src>
from functools import partial

import jax
import jax.numpy as jnp
from jax.experimental import pallas as pl
from jax.experimental.pallas import tpu as pltpu


def _round_up(x, m):
    return (x + m - 1) // m * m


def _conv_bn_relu_pool_kernel(p_ref, w_ref, shift_ref, o_ref):
    """Fused conv-as-matmul (both branches) + folded-BN shift + ReLU + 2x2 pool.

    p_ref     : (4, TM, K2)  bf16  im2col patches of BOTH branches ([p1 | p2]);
                                   axis 0 = position inside the 2x2 pool window
    w_ref     : (K2, OCP)    bf16  block-diagonal BN-scale-folded weights
    shift_ref : (1, OCP)     f32   folded bias/BN shift (per fused channel)
    o_ref     : (TM, OCP)    bf16  pooled output tile (lane-dense last dim)
    """
    q, tm, k2 = p_ref.shape
    # One MXU matmul over all 4 pooling positions (amortizes MXU start/drain).
    # TM % 16 == 0 -> the leading-dim merge is layout-free (no VMEM copy).
    y = jnp.dot(p_ref[...].reshape(q * tm, k2), w_ref[...],
                preferred_element_type=jnp.float32)       # (4*TM, OCP) f32
    y = y.reshape(q, tm, y.shape[-1])
    out = jnp.max(y, axis=0)                              # 2x2 max-pool (raw conv)
    # BN shift + ReLU hoisted out of the pooling max: per-channel constant
    # shift + monotone ReLU commute with max -> identical result, 1/4 the VPU work.
    out = jnp.maximum(out + shift_ref[...], 0.0)
    o_ref[...] = out.astype(o_ref.dtype)                  # bf16 writeback


def _im2col_nhwc(x_nhwc, kh, kw, stride):
    n, h, w, c = x_nhwc.shape
    oh = (h - kh) // stride + 1
    ow = (w - kw) // stride + 1
    cols = [x_nhwc[:, i:i + stride * (oh - 1) + 1:stride,
                   j:j + stride * (ow - 1) + 1:stride, :]
            for i in range(kh) for j in range(kw)]
    return jnp.concatenate(cols, axis=-1), oh, ow          # (N, OH, OW, KH*KW*C)


@partial(jax.jit, static_argnums=(3, 4))
def grouped_conv2d_forward(x1, x2, params, kernel_size, stride):
    """Pallas implementation of GroupedConv2d.forward.  x1, x2: (N, C, H, W)."""
    kh = kw = kernel_size
    n, c, h, w = x1.shape
    oc = params["w1"].shape[0]
    eps = 1e-5
    kdim = kh * kw * c
    k2 = 2 * kdim                           # fused-branch contraction dim
    ocp = _round_up(2 * oc, 128)            # lane-dense fused output channels
                                            # (naturally widens to 256 when 2*OC > 128)

    quad_list, wmats, shifts = [], [], []
    ph = pw = None
    for idx, x in (("1", x1), ("2", x2)):
        # bf16 BEFORE im2col: all wrapper-side copies of the ~9x-amplified
        # patch tensor happen at 2 B/elem.
        x_nhwc = jnp.transpose(x, (0, 2, 3, 1)).astype(jnp.bfloat16)
        patches, oh, ow = _im2col_nhwc(x_nhwc, kh, kw, stride)
        ph, pw = oh // 2, ow // 2           # MaxPool2d(2), floor mode
        patches = patches[:, :ph * 2, :pw * 2, :]
        # group the 4 positions of every 2x2 pooling window on a leading axis
        quads = jnp.stack(
            [patches[:, di::2, dj::2, :] for di in (0, 1) for dj in (0, 1)],
            axis=0)                          # (4, N, PH, PW, kdim) bf16
        quad_list.append(quads.reshape(4, n * ph * pw, kdim))

        wgt = params["w" + idx].astype(jnp.float32)      # (OC, C, KH, KW)
        bias = params["b" + idx].astype(jnp.float32)
        gamma = params["g" + idx].astype(jnp.float32)
        beta = params["beta" + idx].astype(jnp.float32)
        rmean = jnp.zeros((oc,), jnp.float32)            # PyTorch default running stats
        rvar = jnp.ones((oc,), jnp.float32)
        scale = gamma / jnp.sqrt(rvar + eps)
        # fold BN scale into the weights; only a per-channel shift remains
        wmat = jnp.transpose(wgt, (2, 3, 1, 0)).reshape(kdim, oc) * scale[None, :]
        wmats.append(wmat)
        shifts.append((bias - rmean) * scale + beta)

    m2 = n * ph * pw                         # pooled output rows

    # ---- fuse the two branches: p = [p1 | p2], block-diagonal weights ----
    p_fused = jnp.concatenate(quad_list, axis=-1)        # (4, M2, 2*kdim) bf16
    w_bd = jnp.zeros((k2, ocp), jnp.float32)
    w_bd = w_bd.at[:kdim, :oc].set(wmats[0])
    w_bd = w_bd.at[kdim:, oc:2 * oc].set(wmats[1])
    w_bd = w_bd.astype(jnp.bfloat16)                     # (K2, OCP) bf16
    shift_f = jnp.zeros((1, ocp), jnp.float32)
    shift_f = shift_f.at[0, :2 * oc].set(jnp.concatenate(shifts))

    # ---- tile M from an explicit VMEM budget (fits v7x / v5e scoped VMEM) ----
    budget = 20 * 1024 * 1024
    fixed = k2 * ocp * 2 + ocp * 4                        # resident weights + shift
    per_row = 2 * (4 * k2 * 2) + 2 * (ocp * 2)            # dbl-buffered patch + out
    tm = max(16, min(1024, (budget - fixed) // per_row))
    # keep >= 4 M blocks when rows permit (v7x megacore sharding)
    tm = min(tm, max(16, _round_up(pl.cdiv(m2, 4), 16)))
    tm = max(16, (tm // 16) * 16)                         # bf16 sublane alignment
    m2p = _round_up(m2, tm)

    p_fused = jnp.pad(p_fused, ((0, 0), (0, m2p - m2), (0, 0)))

    vmem_limit = int(min(96 * 1024 * 1024,
                         max(32 * 1024 * 1024, 2 * (fixed + tm * per_row))))

    pooled = pl.pallas_call(
        _conv_bn_relu_pool_kernel,
        out_shape=jax.ShapeDtypeStruct((m2p, ocp), jnp.bfloat16),
        grid=(m2p // tm,),
        in_specs=[
            pl.BlockSpec((4, tm, k2), lambda m: (0, m, 0)),
            pl.BlockSpec((k2, ocp), lambda m: (0, 0)),     # resident weights
            pl.BlockSpec((1, ocp), lambda m: (0, 0)),      # resident shift
        ],
        out_specs=pl.BlockSpec((tm, ocp), lambda m: (m, 0)),
        compiler_params=pltpu.CompilerParams(
            dimension_semantics=("parallel",),
            vmem_limit_bytes=vmem_limit),
    )(p_fused, w_bd, shift_f)

    pooled = pooled[:m2].astype(jnp.float32)              # small: cast back to f32
    out1 = jnp.transpose(pooled[:, :oc].reshape(n, ph, pw, oc), (0, 3, 1, 2))
    out2 = jnp.transpose(pooled[:, oc:2 * oc].reshape(n, ph, pw, oc), (0, 3, 1, 2))
    return out1, out2                                      # (N, OC, PH, PW)


def _reference_branch(x, wgt, bias, gamma, beta, stride):
    """Plain-JAX reference: Conv2d + (inference) BN + ReLU + MaxPool2d(2)."""
    eps = 1e-5
    y = jax.lax.conv_general_dilated(
        x, wgt, window_strides=(stride, stride), padding="VALID",
        dimension_numbers=("NCHW", "OIHW", "NCHW"))
    y = y + bias.reshape(1, -1, 1, 1)
    scale = gamma / jnp.sqrt(1.0 + eps)
    y = y * scale.reshape(1, -1, 1, 1) + beta.reshape(1, -1, 1, 1)
    y = jnp.maximum(y, 0.0)
    y = jax.lax.reduce_window(y, -jnp.inf, jax.lax.max,
                              (1, 1, 2, 2), (1, 1, 2, 2), "VALID")
    return y


if __name__ == "__main__":
    N, C, H, W = 2, 4, 16, 16
    OC, KS, STRIDE = 8, 3, 1

    keys = jax.random.split(jax.random.PRNGKey(0), 10)
    x1 = jax.random.normal(keys[0], (N, C, H, W), jnp.float32)
    x2 = jax.random.normal(keys[1], (N, C, H, W), jnp.float32)
    params = {
        "w1": 0.1 * jax.random.normal(keys[2], (OC, C, KS, KS), jnp.float32),
        "b1": 0.1 * jax.random.normal(keys[3], (OC,), jnp.float32),
        "g1": 1.0 + 0.1 * jax.random.normal(keys[4], (OC,), jnp.float32),
        "beta1": 0.1 * jax.random.normal(keys[5], (OC,), jnp.float32),
        "w2": 0.1 * jax.random.normal(keys[6], (OC, C, KS, KS), jnp.float32),
        "b2": 0.1 * jax.random.normal(keys[7], (OC,), jnp.float32),
        "g2": 1.0 + 0.1 * jax.random.normal(keys[8], (OC,), jnp.float32),
        "beta2": 0.1 * jax.random.normal(keys[9], (OC,), jnp.float32),
    }

    out1, out2 = grouped_conv2d_forward(x1, x2, params, KS, STRIDE)
    jax.block_until_ready((out1, out2))

    ph = (H - KS + 1) // 2
    assert out1.shape == (N, OC, ph, ph) and out2.shape == (N, OC, ph, ph)

    ref1 = _reference_branch(x1, params["w1"], params["b1"],
                             params["g1"], params["beta1"], STRIDE)
    ref2 = _reference_branch(x2, params["w2"], params["b2"],
                             params["g2"], params["beta2"], STRIDE)
    assert jnp.allclose(out1, ref1, atol=5e-2, rtol=5e-2)
    assert jnp.allclose(out2, ref2, atol=5e-2, rtol=5e-2)

    print("KERNEL_OK")
</pallas_src>

<mosaic_0001>
module attributes {stable_mosaic.version = 11 : i64} {
  func.func @_conv_bn_relu_pool_kernel(%arg0: i32, %arg1: memref<4x32x72xbf16, #tpu.memory_space<vmem>>, %arg2: memref<72x128xbf16, #tpu.memory_space<vmem>>, %arg3: memref<1x128xf32, #tpu.memory_space<vmem>>, %arg4: memref<32x128xbf16, #tpu.memory_space<vmem>>) attributes {dimension_semantics = [#tpu.dimension_semantics<parallel>], iteration_bounds = array<i64: 4>, scalar_prefetch = 0 : i64, scratch_operands = 0 : i64, tpu.core_type = #tpu.core_type<tc>, window_params = [{transform_indices = @transform_0, window_bounds = array<i64: 4, 32, 72>}, {pipeline_mode = #tpu.pipeline_mode<synchronous>, transform_indices = @transform_1, window_bounds = array<i64: 72, 128>}, {pipeline_mode = #tpu.pipeline_mode<synchronous>, transform_indices = @transform_2, window_bounds = array<i64: 1, 128>}, {transform_indices = @transform_3, window_bounds = array<i64: 32, 128>}]} {
    %c0 = arith.constant 0 : index
    %c0_0 = arith.constant 0 : index
    %c0_1 = arith.constant 0 : index
    %0 = vector.load %arg1[%c0, %c0_0, %c0_1] : memref<4x32x72xbf16, #tpu.memory_space<vmem>>, vector<4x32x72xbf16>
    %1 = vector.shape_cast %0 : vector<4x32x72xbf16> to vector<128x72xbf16>
    %c0_2 = arith.constant 0 : index
    %c0_3 = arith.constant 0 : index
    %2 = vector.load %arg2[%c0_2, %c0_3] : memref<72x128xbf16, #tpu.memory_space<vmem>>, vector<72x128xbf16>
    %cst = arith.constant dense<0.000000e+00> : vector<128x128xf32>
    %3 = tpu.matmul %1, %2, %cst {dimension_numbers = #tpu.dot_dimension_numbers<[1], [0], [0], [1], [0, 0, 1, 1], [], []>} : vector<128x72xbf16>, vector<72x128xbf16>, vector<128x128xf32> -> vector<128x128xf32>
    %4 = vector.shape_cast %3 : vector<128x128xf32> to vector<4x32x128xf32>
    %cst_4 = arith.constant dense<0xFF800000> : vector<32x128xf32>
    %5 = vector.multi_reduction <maximumf>, %4, %cst_4 [0] : vector<4x32x128xf32> to vector<32x128xf32>
    %c0_5 = arith.constant 0 : index
    %c0_6 = arith.constant 0 : index
    %6 = vector.load %arg3[%c0_5, %c0_6] : memref<1x128xf32, #tpu.memory_space<vmem>>, vector<1x128xf32>
    %7 = vector.broadcast %6 : vector<1x128xf32> to vector<32x128xf32>
    %8 = arith.addf %5, %7 : vector<32x128xf32>
    %cst_7 = arith.constant 0.000000e+00 : f32
    %9 = vector.broadcast %cst_7 : f32 to vector<32x128xf32>
    %10 = arith.maximumf %8, %9 : vector<32x128xf32>
    %11 = arith.truncf %10 : vector<32x128xf32> to vector<32x128xbf16>
    %c0_8 = arith.constant 0 : index
    %c0_9 = arith.constant 0 : index
    %12 = vector.load %arg4[%c0_8, %c0_9] : memref<32x128xbf16, #tpu.memory_space<vmem>>, vector<32x128xbf16>
    tpu.vector_store %arg4[%c0_8, %c0_9], %11 {strides = array<i32>} : memref<32x128xbf16, #tpu.memory_space<vmem>>, vector<32x128xbf16>,
    return
  }
  func.func @transform_0(%arg0: i32) -> (i32, i32, i32) {
    %c0_i32 = arith.constant 0 : i32
    %c0_i32_0 = arith.constant 0 : i32
    %c0_i32_1 = arith.constant 0 : i32
    return %c0_i32, %arg0, %c0_i32_0 : i32, i32, i32
  }
  func.func @transform_1(%arg0: i32) -> (i32, i32) {
    %c0_i32 = arith.constant 0 : i32
    %c0_i32_0 = arith.constant 0 : i32
    %c0_i32_1 = arith.constant 0 : i32
    return %c0_i32, %c0_i32_0 : i32, i32
  }
  func.func @transform_2(%arg0: i32) -> (i32, i32) {
    %c0_i32 = arith.constant 0 : i32
    %c0_i32_0 = arith.constant 0 : i32
    %c0_i32_1 = arith.constant 0 : i32
    return %c0_i32, %c0_i32_0 : i32, i32
  }
  func.func @transform_3(%arg0: i32) -> (i32, i32) {
    %c0_i32 = arith.constant 0 : i32
    %c0_i32_0 = arith.constant 0 : i32
    return %arg0, %c0_i32 : i32, i32
  }
}

</mosaic_0001>

<llo_original>
// kernel: grouped_conv2d_forward.1
$region0: #{grouped_conv2d_forward.1}
  #allocation0 [shape = 'u32[]', space=smem, size = 0x4, offset = 0x4, fixed_abs, tag = 'smem constant byte address 0x4 - core index']
  #allocation1 [shape = 'u32[144,128]{1,0:T(1,128)}', space=vmem, size = 0x12000, scoped, tag = 'internal scratch']
  %s0 = inlined_call_operand.vmem [shape: bf16[4,128,72], index: 0, kind: input, shape index: {}]
  %s1 = inlined_call_operand.vmem [shape: bf16[72,128], index: 1, kind: input, shape index: {}]
  %s2 = inlined_call_operand.vmem [shape: f32[1,128], index: 2, kind: input, shape index: {}]
  %s3 = inlined_call_operand.vmem [shape: bf16[128,128], index: 3, kind: output, shape index: {}]
  %s4 = sld [smem:[#allocation0]]
  $region86: #{grouped_conv2d_forward.1} parent=0
    _
  %s6 = ssub.s32 1, %s4
  %s7 = scalar_select 0, %s6, %s4
  $region1: #{grouped_conv2d_forward.1} parent=0
    #allocation2 [shape = 'u8[65536]{0}', space=vmem, size = 0x10000, scoped, tag = 'input window, operand 0']
    loop: start=0, step=1, limit=6
    $region2: #{grouped_conv2d_forward.1} parent=1 // loop_pre_header
      _
    $region3: #{grouped_conv2d_forward.1} parent=1 // loop_header
      %s9 = sphi 0, %s13
      %p10 = scmp.ge.s32.totalorder %s9, 6
      %s19 = sphi 0, %s21
      %s22 = sphi 0, %s19
      %s23 = sphi 0, %s22
      %s39 = sphi 0, %s23
      %s43 = sphi 0, %s43
      %s45 = sphi 0, %s43
      %s46 = sphi 0, %s45
      %s60 = sphi 0, %s46
      %s64 = sphi 0, %s64
      %s66 = sphi 0, %s64
      %s67 = sphi 0, %s66
      %s81 = sphi 0, %s67
      %s87 = sphi 0, %s89
      %s90 = sphi 0, %s87
      %s91 = sphi 0, %s90
      %s107 = sphi 0, %s91
    $region4: #{grouped_conv2d_forward.1} parent=1 // loop_header_branch
      %12 = sbr.rel (%p10) target = $region8
    $region5: #{grouped_conv2d_forward.1} parent=1 // loop_body
      %s14 = ssub.s32 %s9, 1
      %s15 = ssub.s32 %s9, 2
      %s16 = sadd.s32 %s9, 1
      %s17 = ssub.s32 %s9, %s16
      %p18 = scmp.eq.s32.totalorder %s17, 0
      %s20 = sadd.s32 %s19, 1
      %s21 = scalar_select %p18, %s19, %s20
      %p24 = pneg %p18
      %p25 = scmp.eq.s32.totalorder %s9, 3
      %p26 = por %p24, %p25
      %p27 = scmp.ne.s32.totalorder %s19, %s22
      %p28 = scmp.eq.s32.totalorder %s9, 0
      %p29 = por %p27, %p28
      %p30 = scmp.ne.s32.totalorder %s19, %s22
      %p31 = scmp.eq.s32.totalorder %s14, 3
      %p32 = por %p30, %p31
      %p33 = scmp.ne.s32.totalorder %s22, %s23
      %p34 = scmp.eq.s32.totalorder %s14, 0
      %p35 = por %p33, %p34
      %p36 = scmp.ne.s32.totalorder %s22, %s23
      %p37 = scmp.eq.s32.totalorder %s15, 3
      %p38 = por %p36, %p37
      %p40 = scmp.ne.s32.totalorder %s23, %s39
      %p41 = scmp.eq.s32.totalorder %s15, 0
      %p42 = por %p40, %p41
      %s44 = sadd.s32 %s43, 1
      %p47 = scmp.eq.s32.totalorder %s9, 3
      %p48 = scmp.ne.s32.totalorder %s43, %s45
      %p49 = scmp.eq.s32.totalorder %s9, 0
      %p50 = por %p48, %p49
      %p51 = scmp.ne.s32.totalorder %s43, %s45
      %p52 = scmp.eq.s32.totalorder %s14, 3
      %p53 = por %p51, %p52
      %p54 = scmp.ne.s32.totalorder %s45, %s46
      %p55 = scmp.eq.s32.totalorder %s14, 0
      %p56 = por %p54, %p55
      %p57 = scmp.ne.s32.totalorder %s45, %s46
      %p58 = scmp.eq.s32.totalorder %s15, 3
      %p59 = por %p57, %p58
      %p61 = scmp.ne.s32.totalorder %s46, %s60
      %p62 = scmp.eq.s32.totalorder %s15, 0
      %p63 = por %p61, %p62
      %s65 = sadd.s32 %s64, 1
      %p68 = scmp.eq.s32.totalorder %s9, 3
      %p69 = scmp.ne.s32.totalorder %s64, %s66
      %p70 = scmp.eq.s32.totalorder %s9, 0
      %p71 = por %p69, %p70
      %p72 = scmp.ne.s32.totalorder %s64, %s66
      %p73 = scmp.eq.s32.totalorder %s14, 3
      %p74 = por %p72, %p73
      %p75 = scmp.ne.s32.totalorder %s66, %s67
      %p76 = scmp.eq.s32.totalorder %s14, 0
      %p77 = por %p75, %p76
      %p78 = scmp.ne.s32.totalorder %s66, %s67
      %p79 = scmp.eq.s32.totalorder %s15, 3
      %p80 = por %p78, %p79
      %p82 = scmp.ne.s32.totalorder %s67, %s81
      %p83 = scmp.eq.s32.totalorder %s15, 0
      %p84 = por %p82, %p83
      %s85 = ssub.s32 %s9, %s16
      %p86 = scmp.eq.s32.totalorder %s85, 0
      %s88 = sadd.s32 %s87, 1
      %s89 = scalar_select %p86, %s87, %s88
      %p92 = pneg %p86
      %p93 = scmp.eq.s32.totalorder %s9, 3
      %p94 = por %p92, %p93
      %p95 = scmp.ne.s32.totalorder %s87, %s90
      %p96 = scmp.eq.s32.totalorder %s9, 0
      %p97 = por %p95, %p96
      %p98 = scmp.ne.s32.totalorder %s87, %s90
      %p99 = scmp.eq.s32.totalorder %s14, 3
      %p100 = por %p98, %p99
      %p101 = scmp.ne.s32.totalorder %s90, %s91
      %p102 = scmp.eq.s32.totalorder %s14, 0
      %p103 = por %p101, %p102
      %p104 = scmp.ne.s32.totalorder %s90, %s91
      %p105 = scmp.eq.s32.totalorder %s15, 3
      %p106 = por %p104, %p105
      %p108 = scmp.ne.s32.totalorder %s91, %s107
      %p109 = scmp.eq.s32.totalorder %s15, 0
      %p110 = por %p108, %p109
      %p111 = scmp.le.s32.totalorder 1, %s9
      %p112 = scmp.lt.s32.totalorder %s9, 5
      %p113 = pnand %p111, %p112
      %p114 = pneg %p113
      // Predicated region
      $region9: #{grouped_conv2d_forward.1} parent=5 // pred_check
        _
      $region10: #{grouped_conv2d_forward.1} parent=5 // pred_check_branch
        %116 = sbr.rel (%p113) target = $region12
      $region11: #{grouped_conv2d_forward.1} parent=5 // pred_region
        %s117 = ssub.s32 %s9, 1
        // Predicated region
        $region13: #{grouped_conv2d_forward.1} parent=11 // pred_check
          %p118 = pneg %p56
        $region14: #{grouped_conv2d_forward.1} parent=11 // pred_check_branch
          %120 = sbr.rel (%p118) target = $region16
        $region15: #{grouped_conv2d_forward.1} parent=11 // pred_region
          _
        $region16: #{grouped_conv2d_forward.1} parent=11 // pred_fallthru
          _
        // Predicated region
        $region17: #{grouped_conv2d_forward.1} parent=11 // pred_check
          %p121 = pneg %p77
        $region18: #{grouped_conv2d_forward.1} parent=11 // pred_check_branch
          %123 = sbr.rel (%p121) target = $region20
        $region19: #{grouped_conv2d_forward.1} parent=11 // pred_region
          _
        $region20: #{grouped_conv2d_forward.1} parent=11 // pred_fallthru
          _
      $region12: #{grouped_conv2d_forward.1} parent=5 // pred_fallthru
        _
      %p124 = scmp.lt.s32.totalorder %s9, 4
      // Predicated region
      $region21: #{grouped_conv2d_forward.1} parent=5 // pred_check
        %p125 = pneg %p124
      $region22: #{grouped_conv2d_forward.1} parent=5 // pred_check_branch
        %127 = sbr.rel (%p125) target = $region24
      $region23: #{grouped_conv2d_forward.1} parent=5 // pred_region
        // Predicated region
        $region25: #{grouped_conv2d_forward.1} parent=23 // pred_check
          %p128 = pneg %p29
        $region26: #{grouped_conv2d_forward.1} parent=23 // pred_check_branch
          %130 = sbr.rel (%p128) target = $region28
        $region27: #{grouped_conv2d_forward.1} parent=23 // pred_region
          %s131 = sand.u32 %s19, 1
          %s132 = sand.u32 %s19, 1
          %s133 = smul.addr %s132, 64
          %s134 = scalar_lea.vmem [#allocation2], %s133
          %s135 = smul.u32 4, %s9
          %s136 = smul.addr %s135, 4
          %s137 = scalar_lea.vmem %s0, %s136
          // Predicated region
          $region29: #{grouped_conv2d_forward.1} parent=27 // pred_check
            _
          $region30: #{grouped_conv2d_forward.1} parent=27 // pred_check_branch
            %139 = sbr.rel (0) target = $region32
          $region31: #{grouped_conv2d_forward.1} parent=27 // pred_region
            // Predicated region
            $region33: #{grouped_conv2d_forward.1} parent=31 // pred_check
              _
            $region34: #{grouped_conv2d_forward.1} parent=31 // pred_check_branch
              %141 = sbr.rel target = $region36
            $region35: #{grouped_conv2d_forward.1} parent=31 // pred_region
              // Predicated region
              $region48: #{grouped_conv2d_forward.1} parent=35 // pred_check
                _
              $region49: #{grouped_conv2d_forward.1} parent=35 // pred_check_branch
                %187 = sbr.rel (0) target = $region51
              $region50: #{grouped_conv2d_forward.1} parent=35 // pred_region
                loop: start=0, step=1, limit=1
                $region52: #{grouped_conv2d_forward.1} parent=50 // loop_pre_header
                  _
                $region53: #{grouped_conv2d_forward.1} parent=50 // loop_header
                  %s189 = sphi 0, %s193
                  %p190 = scmp.ge.s32.totalorder %s189, 1
                  %s194 = sphi %s137, %s137
                  %s195 = sphi %s134, %s134
                $region54: #{grouped_conv2d_forward.1} parent=50 // loop_header_branch
                  %192 = sbr.rel (%p190) target = $region58
                $region55: #{grouped_conv2d_forward.1} parent=50 // loop_body
                  _
                $region56: #{grouped_conv2d_forward.1} parent=50 // loop_footer
                  %s193 = sadd.s32 1, %s189
                $region57: #{grouped_conv2d_forward.1} parent=50 // loop_footer_branch
                  %188 = sbr.rel target = $region53
                $region58: #{grouped_conv2d_forward.1} parent=50 // loop_exit
                  _
                %s197 = ssub.s32 16, 1
                loop: start=0, step=1, limit=1
                $region59: #{grouped_conv2d_forward.1} parent=50 // loop_pre_header
                  _
                $region60: #{grouped_conv2d_forward.1} parent=50 // loop_header
                  %s199 = sphi 0, %s203
                  %p200 = scmp.ge.s32.totalorder %s199, 1
                  %s204 = sphi %s137, %s137
                  %s205 = sphi %s134, %s134
                $region61: #{grouped_conv2d_forward.1} parent=50 // loop_header_branch
                  %202 = sbr.rel (%p200) target = $region65
                $region62: #{grouped_conv2d_forward.1} parent=50 // loop_body
                  %v206 = vld [vmem:[%s204] sm:%s197]
                  %207 = vst [vmem:[%s205] sm:%s197] %v206
                  %v208 = vld [vmem:[%s204 + $0x4] sm:%s197]
                  %209 = vst [vmem:[%s205 + $0x4] sm:%s197] %v208
                  %v210 = vld [vmem:[%s204 + $0x8] sm:%s197]
                  %211 = vst [vmem:[%s205 + $0x8] sm:%s197] %v210
                  %v212 = vld [vmem:[%s204 + $0xc] sm:%s197]
                  %213 = vst [vmem:[%s205 + $0xc] sm:%s197] %v212
                  %v214 = vld [vmem:[%s204 + $0x40] sm:%s197]
                  %215 = vst [vmem:[%s205 + $0x10] sm:%s197] %v214
                  %v216 = vld [vmem:[%s204 + $0x44] sm:%s197]
                  %217 = vst [vmem:[%s205 + $0x14] sm:%s197] %v216
                  %v218 = vld [vmem:[%s204 + $0x48] sm:%s197]
                  %219 = vst [vmem:[%s205 + $0x18] sm:%s197] %v218
                  %v220 = vld [vmem:[%s204 + $0x4c] sm:%s197]
                  %221 = vst [vmem:[%s205 + $0x1c] sm:%s197] %v220
                  %v222 = vld [vmem:[%s204 + $0x80] sm:%s197]
                  %223 = vst [vmem:[%s205 + $0x20] sm:%s197] %v222
                  %v224 = vld [vmem:[%s204 + $0x84] sm:%s197]
                  %225 = vst [vmem:[%s205 + $0x24] sm:%s197] %v224
                  %v226 = vld [vmem:[%s204 + $0x88] sm:%s197]
                  %227 = vst [vmem:[%s205 + $0x28] sm:%s197] %v226
                  %v228 = vld [vmem:[%s204 + $0x8c] sm:%s197]
                  %229 = vst [vmem:[%s205 + $0x2c] sm:%s197] %v228
                  %v230 = vld [vmem:[%s204 + $0xc0] sm:%s197]
                  %231 = vst [vmem:[%s205 + $0x30] sm:%s197] %v230
                  %v232 = vld [vmem:[%s204 + $0xc4] sm:%s197]
                  %233 = vst [vmem:[%s205 + $0x34] sm:%s197] %v232
                  %v234 = vld [vmem:[%s204 + $0xc8] sm:%s197]
                  %235 = vst [vmem:[%s205 + $0x38] sm:%s197] %v234
                  %v236 = vld [vmem:[%s204 + $0xcc] sm:%s197]
                  %237 = vst [vmem:[%s205 + $0x3c] sm:%s197] %v236
                $region63: #{grouped_conv2d_forward.1} parent=50 // loop_footer
                  %s203 = sadd.s32 1, %s199
                $region64: #{grouped_conv2d_forward.1} parent=50 // loop_footer_branch
                  %198 = sbr.rel target = $region60
                $region65: #{grouped_conv2d_forward.1} parent=50 // loop_exit
                  _
              $region51: #{grouped_conv2d_forward.1} parent=35 // pred_fallthru
                _
            $region36: #{grouped_conv2d_forward.1} parent=31 // pred_fallthru
              _
            // Predicated region
            $region37: #{grouped_conv2d_forward.1} parent=31 // pred_check
              _
            $region38: #{grouped_conv2d_forward.1} parent=31 // pred_check_branch
              %143 = sbr.rel (0) target = $region40
            $region39: #{grouped_conv2d_forward.1} parent=31 // pred_region
              %s145 = ssub.s32 16, 1
              loop: start=0, step=1, limit=1
              $region41: #{grouped_conv2d_forward.1} parent=39 // loop_pre_header
                _
              $region42: #{grouped_conv2d_forward.1} parent=39 // loop_header
                %s147 = sphi 0, %s151
                %p148 = scmp.ge.s32.totalorder %s147, 1
                %s152 = sphi %s137, %s137
                %s153 = sphi %s134, %s134
              $region43: #{grouped_conv2d_forward.1} parent=39 // loop_header_branch
                %150 = sbr.rel (%p148) target = $region47
              $region44: #{grouped_conv2d_forward.1} parent=39 // loop_body
                %v154 = vld [vmem:[%s152] sm:%s145]
                %155 = vst [vmem:[%s153] sm:%s145] %v154
                %v156 = vld [vmem:[%s152 + $0x4] sm:%s145]
                %157 = vst [vmem:[%s153 + $0x4] sm:%s145] %v156
                %v158 = vld [vmem:[%s152 + $0x8] sm:%s145]
                %159 = vst [vmem:[%s153 + $0x8] sm:%s145] %v158
                %v160 = vld [vmem:[%s152 + $0xc] sm:%s145]
                %161 = vst [vmem:[%s153 + $0xc] sm:%s145] %v160
                %v162 = vld [vmem:[%s152 + $0x40] sm:%s145]
                %163 = vst [vmem:[%s153 + $0x10] sm:%s145] %v162
                %v164 = vld [vmem:[%s152 + $0x44] sm:%s145]
                %165 = vst [vmem:[%s153 + $0x14] sm:%s145] %v164
                %v166 = vld [vmem:[%s152 + $0x48] sm:%s145]
                %167 = vst [vmem:[%s153 + $0x18] sm:%s145] %v166
                %v168 = vld [vmem:[%s152 + $0x4c] sm:%s145]
                %169 = vst [vmem:[%s153 + $0x1c] sm:%s145] %v168
                %v170 = vld [vmem:[%s152 + $0x80] sm:%s145]
                %171 = vst [vmem:[%s153 + $0x20] sm:%s145] %v170
                %v172 = vld [vmem:[%s152 + $0x84] sm:%s145]
                %173 = vst [vmem:[%s153 + $0x24] sm:%s145] %v172
                %v174 = vld [vmem:[%s152 + $0x88] sm:%s145]
                %175 = vst [vmem:[%s153 + $0x28] sm:%s145] %v174
                %v176 = vld [vmem:[%s152 + $0x8c] sm:%s145]
                %177 = vst [vmem:[%s153 + $0x2c] sm:%s145] %v176
                %v178 = vld [vmem:[%s152 + $0xc0] sm:%s145]
                %179 = vst [vmem:[%s153 + $0x30] sm:%s145] %v178
                %v180 = vld [vmem:[%s152 + $0xc4] sm:%s145]
                %181 = vst [vmem:[%s153 + $0x34] sm:%s145] %v180
                %v182 = vld [vmem:[%s152 + $0xc8] sm:%s145]
                %183 = vst [vmem:[%s153 + $0x38] sm:%s145] %v182
                %v184 = vld [vmem:[%s152 + $0xcc] sm:%s145]
                %185 = vst [vmem:[%s153 + $0x3c] sm:%s145] %v184
              $region45: #{grouped_conv2d_forward.1} parent=39 // loop_footer
                %s151 = sadd.s32 1, %s147
              $region46: #{grouped_conv2d_forward.1} parent=39 // loop_footer_branch
                %146 = sbr.rel target = $region42
              $region47: #{grouped_conv2d_forward.1} parent=39 // loop_exit
                _
            $region40: #{grouped_conv2d_forward.1} parent=31 // pred_fallthru
              _
          $region32: #{grouped_conv2d_forward.1} parent=27 // pred_fallthru
            _
          %238 = vnop
        $region28: #{grouped_conv2d_forward.1} parent=23 // pred_fallthru
          _
      $region24: #{grouped_conv2d_forward.1} parent=5 // pred_fallthru
        _
      %p239 = scmp.le.s32.totalorder 1, %s9
      %p240 = scmp.lt.s32.totalorder %s9, 5
      %p241 = pnand %p239, %p240
      %p242 = pneg %p241
      // Predicated region
      $region66: #{grouped_conv2d_forward.1} parent=5 // pred_check
        _
      $region67: #{grouped_conv2d_forward.1} parent=5 // pred_check_branch
        %244 = sbr.rel (%p241) target = $region69
      $region68: #{grouped_conv2d_forward.1} parent=5 // pred_region
        %s245 = ssub.s32 %s9, 1
        %s246 = sand.u32 %s22, 1
        %s247 = sand.u32 %s22, 1
        %s248 = smul.addr %s247, 64
        %s249 = scalar_lea.vmem [#allocation2], %s248
        // Predicated region
        $region70: #{grouped_conv2d_forward.1} parent=68 // pred_check
          %p250 = pneg %p35
        $region71: #{grouped_conv2d_forward.1} parent=68 // pred_check_branch
          %252 = sbr.rel (%p250) target = $region73
        $region72: #{grouped_conv2d_forward.1} parent=68 // pred_region
          _
        $region73: #{grouped_conv2d_forward.1} parent=68 // pred_fallthru
          _
        %s253 = sand.u32 %s22, 1
        %s254 = sand.u32 %s22, 1
        %s255 = smul.addr %s254, 64
        %s256 = scalar_lea.vmem [#allocation2], %s255
        %p257 = pneg %p35
        %p258 = pneg %p32
        %p259 = pneg %p56
        %p260 = pneg %p53
        %p261 = pneg %p77
        %p262 = pneg %p74
        %p263 = pneg %p103
        %p264 = pneg %p100
        %s265 = smul.u32 4, %s14
        %p266 = scmp.lt.s32.totalorder %s265, 15
        %s267 = scalar_select %p266, %s265, 15
        %s268 = smul.addr %s267, 4
        %s269 = scalar_lea.vmem %s3, %s268
        %s270 = smul.u32 4, %s14
        %s271 = smul.u32 4, %s14
        %p272 = scmp.lt.s32.totalorder %s271, 15
        %s273 = scalar_select %p272, %s271, 15
        %s274 = smul.addr %s273, 4
        %s275 = scalar_lea.vmem %s3, %s274
        %s276 = smul.u32 4, %s14
        %v278 = vld [vmem:[%s249] sm:$0xf]
        %v279 = vld [vmem:[%s249 + $0x4] sm:$0xf]
        %v280 = vld [vmem:[%s249 + $0x8] sm:$0xf]
        %v281 = vld [vmem:[%s249 + $0xc] sm:$0xf]
        %v282 = vld [vmem:[%s249 + $0x10] sm:$0xf]
        %v283 = vld [vmem:[%s249 + $0x14] sm:$0xf]
        %v284 = vld [vmem:[%s249 + $0x18] sm:$0xf]
        %v285 = vld [vmem:[%s249 + $0x1c] sm:$0xf]
        %v286 = vld [vmem:[%s249 + $0x20] sm:$0xf]
        %v287 = vld [vmem:[%s249 + $0x24] sm:$0xf]
        %v288 = vld [vmem:[%s249 + $0x28] sm:$0xf]
        %v289 = vld [vmem:[%s249 + $0x2c] sm:$0xf]
        %v290 = vld [vmem:[%s249 + $0x30] sm:$0xf]
        %v291 = vld [vmem:[%s249 + $0x34] sm:$0xf]
        %v292 = vld [vmem:[%s249 + $0x38] sm:$0xf]
        %v293 = vld [vmem:[%s249 + $0x3c] sm:$0xf]
        %v294 = vld [vmem:[%s1] sm:$0xf]
        %v295 = vld [vmem:[%s1 + $0x4] sm:$0xf]
        %v296 = vld [vmem:[%s1 + $0x8] sm:$0xf]
        %v297 = vld [vmem:[%s1 + $0xc] sm:$0xf]
        %v298 = vld [vmem:[%s1 + $0x10] sm:$0xf]
        %v299 = vld [vmem:[%s1 + $0x14] sm:$0xf]
        %v300 = vld [vmem:[%s1 + $0x18] sm:$0xf]
        %v301 = vld [vmem:[%s1 + $0x1c] sm:$0xf]
        %v302 = vld [vmem:[%s1 + $0x20] sm:$0xf]
        %v319 = vunpack.c.l.b16 %v278
        %v320 = vunpack.c.l.b16 %v279
        %v321 = vunpack.c.l.b16 %v280
        %v322 = vunpack.c.l.b16 %v281
        %v323 = vunpack.c.l.b16 %v282
        %v324 = vunpack.c.l.b16 %v283
        %v325 = vunpack.c.l.b16 %v284
        %v326 = vunpack.c.l.b16 %v285
        %v327 = vunpack.c.l.b16 %v286
        %v328 = vunpack.c.l.b16 %v287
        %v329 = vunpack.c.l.b16 %v288
        %v330 = vunpack.c.l.b16 %v289
        %v331 = vunpack.c.l.b16 %v290
        %v332 = vunpack.c.l.b16 %v291
        %v333 = vunpack.c.l.b16 %v292
        %v334 = vunpack.c.l.b16 %v293
        %v335 = vpack.c.b16 %v320, %v319
        %v336 = vpack.c.b16 %v322, %v321
        %v337 = vpack.c.b16 %v324, %v323
        %v338 = vpack.c.b16 %v326, %v325
        %v339 = vpack.c.b16 %v328, %v327
        %v340 = vpack.c.b16 %v330, %v329
        %v341 = vpack.c.b16 %v332, %v331
        %v342 = vpack.c.b16 %v334, %v333
        %v352 = vunpack.c.l.b16 %v294
        %v353 = vunpack.c.l.b16 %v295
        %v354 = vunpack.c.l.b16 %v296
        %v355 = vunpack.c.l.b16 %v297
        %v356 = vunpack.c.l.b16 %v298
        %v357 = vunpack.c.l.b16 %v299
        %v358 = vunpack.c.l.b16 %v300
        %v359 = vunpack.c.l.b16 %v301
        %v360 = vunpack.c.l.b16 %v302
        %v361 = vpack.c.b16 %v353, %v352
        %v362 = vpack.c.b16 %v355, %v354
        %v363 = vpack.c.b16 %v357, %v356
        %v364 = vpack.c.b16 %v359, %v358
        %v365 = vpack.c.b16 %v360, %v360
        %vm370 = vcmask 588800
        %v372 = vsel %vm370, %v335, 0
        %v375 = vsel %vm370, %v336, 0
        %v378 = vsel %vm370, %v337, 0
        %v381 = vsel %vm370, %v338, 0
        %v384 = vsel %vm370, %v339, 0
        %v387 = vsel %vm370, %v340, 0
        %v390 = vsel %vm370, %v341, 0
        %v393 = vsel %vm370, %v342, 0
        %vm395 = vcmask 1043456
        %v397 = vsel %vm395, %v365, 0
        %399 = vmatprep.subr.bf16.mxu0 0
        %400 = vmatpush1.bf16.msra.mxu0 0
        %401 = vmatprep.subr.bf16.mxu0 0
        %402 = vmatpush1.bf16.msra.mxu0 0
        %403 = vmatprep.subr.bf16.mxu0 0
        %404 = vmatpush1.bf16.msra.mxu0 0
        %405 = vmatprep.subr.bf16.mxu0 0
        %406 = vmatpush1.bf16.msra.mxu0 %v397
        %407 = vmatprep.subr.bf16.mxu0 0
        %408 = vmatpush1.bf16.msra.mxu0 %v364
        %409 = vmatprep.subr.bf16.mxu0 0
        %410 = vmatpush1.bf16.msra.mxu0 %v363
        %411 = vmatprep.subr.bf16.mxu0 0
        %412 = vmatpush1.bf16.msra.mxu0 %v362
        %413 = vmatprep.subr.bf16.mxu0 0
        %414 = vmatpush1.bf16.msra.mxu0 %v361
        %415 = vmatprep.subr.bf16.mxu0 0
        %416 = vmatpush2.bf16.msra.mxu0 0
        %417 = vmatprep.subr.bf16.mxu0 0
        %418 = vmatpush2.bf16.msra.mxu0 0
        %419 = vmatprep.subr.bf16.mxu0 0
        %420 = vmatpush2.bf16.msra.mxu0 0
        %421 = vmatprep.subr.bf16.mxu0 0
        %422 = vmatpush2.bf16.msra.mxu0 0
        %423 = vmatprep.subr.bf16.mxu0 0
        %424 = vmatpush2.bf16.msra.mxu0 0
        %425 = vmatprep.subr.bf16.mxu0 0
        %426 = vmatpush2.bf16.msra.mxu0 0
        %427 = vmatprep.subr.bf16.mxu0 0
        %428 = vmatpush2.bf16.msra.mxu0 0
        %429 = vmatprep.subr.bf16.mxu0 0
        %430 = vmatpush2.bf16.msra.mxu0 0
        %431 = vmatprep.mubr.bf16.mxu0 0
        %432 = vmatmul.mubr.bf16.gmra.mxu0 %v372
        %v433 = vpop.f32.mrf.mxu0
        %v434 = vadd.f32 0.0, %v433
        %v435 = vpop.f32.mrf.mxu0
        %v436 = vpop.f32.mrf.mxu0
        %v437 = vadd.f32 0.0, %v436
        %v438 = vpop.f32.mrf.mxu0
        %439 = vmatprep.mubr.bf16.mxu0 0
        %440 = vmatmul.mubr.bf16.gmra.mxu0 %v375
        %v441 = vpop.f32.mrf.mxu0
        %v442 = vadd.f32 0.0, %v441
        %v443 = vpop.f32.mrf.mxu0
        %v444 = vpop.f32.mrf.mxu0
        %v445 = vadd.f32 0.0, %v444
        %v446 = vpop.f32.mrf.mxu0
        %447 = vmatprep.mubr.bf16.mxu0 0
        %448 = vmatmul.mubr.bf16.gmra.mxu0 %v378
        %v449 = vpop.f32.mrf.mxu0
        %v450 = vadd.f32 0.0, %v449
        %v451 = vpop.f32.mrf.mxu0
        %v452 = vpop.f32.mrf.mxu0
        %v453 = vadd.f32 0.0, %v452
        %v454 = vpop.f32.mrf.mxu0
        %455 = vmatprep.mubr.bf16.mxu0 0
        %456 = vmatmul.mubr.bf16.gmra.mxu0 %v381
        %v457 = vpop.f32.mrf.mxu0
        %v458 = vadd.f32 0.0, %v457
        %v459 = vpop.f32.mrf.mxu0
        %v460 = vpop.f32.mrf.mxu0
        %v461 = vadd.f32 0.0, %v460
        %v462 = vpop.f32.mrf.mxu0
        %463 = vmatprep.mubr.bf16.mxu0 0
        %464 = vmatmul.mubr.bf16.gmra.mxu0 %v384
        %v465 = vpop.f32.mrf.mxu0
        %v466 = vadd.f32 0.0, %v465
        %v467 = vpop.f32.mrf.mxu0
        %v468 = vpop.f32.mrf.mxu0
        %v469 = vadd.f32 0.0, %v468
        %v470 = vpop.f32.mrf.mxu0
        %471 = vmatprep.mubr.bf16.mxu0 0
        %472 = vmatmul.mubr.bf16.gmra.mxu0 %v387
        %v473 = vpop.f32.mrf.mxu0
        %v474 = vadd.f32 0.0, %v473
        %v475 = vpop.f32.mrf.mxu0
        %v476 = vpop.f32.mrf.mxu0
        %v477 = vadd.f32 0.0, %v476
        %v478 = vpop.f32.mrf.mxu0
        %479 = vmatprep.mubr.bf16.mxu0 0
        %480 = vmatmul.mubr.bf16.gmra.mxu0 %v390
        %v481 = vpop.f32.mrf.mxu0
        %v482 = vadd.f32 0.0, %v481
        %v483 = vpop.f32.mrf.mxu0
        %v484 = vpop.f32.mrf.mxu0
        %v485 = vadd.f32 0.0, %v484
        %v486 = vpop.f32.mrf.mxu0
        %487 = vmatprep.mubr.bf16.mxu0 0
        %488 = vmatmul.mubr.bf16.gmra.mxu0 %v393
        %v489 = vpop.f32.mrf.mxu0
        %v490 = vadd.f32 0.0, %v489
        %v491 = vpop.f32.mrf.mxu0
        %v492 = vpop.f32.mrf.mxu0
        %v493 = vadd.f32 0.0, %v492
        %v494 = vpop.f32.mrf.mxu0
        %495 = vdwg.mxu0
        %v496 = vmax.f32 %v434, %v450
        %v497 = vmax.f32 %v496, %v466
        %v498 = vmax.f32 %v497, %v482
        %v499 = vmax.f32 %v437, %v453
        %v500 = vmax.f32 %v499, %v469
        %v501 = vmax.f32 %v500, %v485
        %v502 = vmax.f32 %v442, %v458
        %v503 = vmax.f32 %v502, %v474
        %v504 = vmax.f32 %v503, %v490
        %v505 = vmax.f32 %v445, %v461
        %v506 = vmax.f32 %v505, %v477
        %v507 = vmax.f32 %v506, %v493
        %v508 = vld [vmem:[%s2] sm:$0x1]
        %v510 = vlaneseq
        %v511 = vshrl.u32 %v510, 7
        %v512 = vsub.s32 0, %v511
        %v513 = vrot.slane %v508, %v512
        %v515 = vadd.f32 %v498, %v513
        %v516 = vadd.f32 %v501, %v513
        %v517 = vadd.f32 %v504, %v513
        %v518 = vadd.f32 %v507, %v513
        %v519 = vmax.f32 %v515, 0.0
        %v520 = vmax.f32 %v516, 0.0
        %v521 = vmax.f32 %v517, 0.0
        %v522 = vmax.f32 %v518, 0.0
        %v523 = vpack.c.bf16 %v520, %v519
        %v524 = vpack.c.bf16 %v522, %v521
        %v527 = vunpack.c.l.b16 %v523
        %v528 = vunpack.c.h.b16 %v523
        %v529 = vunpack.c.l.b16 %v524
        %v530 = vunpack.c.h.b16 %v524
        %v531 = vpack.c.b16 %v527, %v527
        %v532 = vpack.c.b16 %v528, %v528
        %v533 = vpack.c.b16 %v529, %v529
        %v534 = vpack.c.b16 %v530, %v530
        %539 = vst [vmem:[%s275] sm:$0xf] %v531
        %540 = vst [vmem:[%s275 + $0x4] sm:$0xf] %v532
        %541 = vst [vmem:[%s275 + $0x8] sm:$0xf] %v533
        %542 = vst [vmem:[%s275 + $0xc] sm:$0xf] %v534
        %s543 = smul.u32 4, %s14
        %p544 = scmp.lt.s32.totalorder %s543, 15
        %s545 = scalar_select %p544, %s543, 15
        %s546 = smul.addr %s545, 4
        %s547 = scalar_lea.vmem %s3, %s546
        // Predicated region
        $region74: #{grouped_conv2d_forward.1} parent=68 // pred_check
          %p548 = pneg %p100
        $region75: #{grouped_conv2d_forward.1} parent=68 // pred_check_branch
          %550 = sbr.rel (%p548) target = $region77
        $region76: #{grouped_conv2d_forward.1} parent=68 // pred_region
          %s551 = smul.u32 4, %s14
        $region77: #{grouped_conv2d_forward.1} parent=68 // pred_fallthru
          _
      $region69: #{grouped_conv2d_forward.1} parent=5 // pred_fallthru
        _
      %p552 = scmp.le.s32.totalorder 2, %s9
      // Predicated region
      $region78: #{grouped_conv2d_forward.1} parent=5 // pred_check
        %p553 = pneg %p552
      $region79: #{grouped_conv2d_forward.1} parent=5 // pred_check_branch
        %555 = sbr.rel (%p553) target = $region81
      $region80: #{grouped_conv2d_forward.1} parent=5 // pred_region
        %s556 = ssub.s32 %s9, 2
        // Predicated region
        $region82: #{grouped_conv2d_forward.1} parent=80 // pred_check
          %p557 = pneg %p106
        $region83: #{grouped_conv2d_forward.1} parent=80 // pred_check_branch
          %559 = sbr.rel (%p557) target = $region85
        $region84: #{grouped_conv2d_forward.1} parent=80 // pred_region
          %s560 = smul.u32 4, %s15
          %p561 = scmp.lt.s32.totalorder %s560, 15
          %s562 = scalar_select %p561, %s560, 15
          %s563 = smul.addr %s562, 4
          %s564 = scalar_lea.vmem %s3, %s563
        $region85: #{grouped_conv2d_forward.1} parent=80 // pred_fallthru
          _
      $region81: #{grouped_conv2d_forward.1} parent=5 // pred_fallthru
        _
    $region6: #{grouped_conv2d_forward.1} parent=1 // loop_footer
      %s13 = sadd.s32 1, %s9
    $region7: #{grouped_conv2d_forward.1} parent=1 // loop_footer_branch
      %8 = sbr.rel target = $region3
    $region8: #{grouped_conv2d_forward.1} parent=1 // loop_exit
      _

</llo_original>
